<compile_context>
chip_gen: v6e
topology: v6e:2x2x1
jax: 0.10.0
libtpu: 0.0.40
codegen_flags: <defaults>
</compile_context>

<pallas_src>
import functools

import jax
import jax.numpy as jnp
from jax.experimental import pallas as pl
from jax.experimental.pallas import tpu as pltpu

LANE = 128      # lane width: pad feature / class / K axes to multiples of this
SUBLANE = 8     # sublane height: keep row splits multiples of this


def _round_up(x, m):
    return ((x + m - 1) // m) * m


def _pad2d(x, rows, cols, dtype):
    x = jnp.asarray(x, jnp.float32)
    out = jnp.zeros((rows, cols), jnp.float32)
    out = out.at[: x.shape[0], : x.shape[1]].set(x)
    return out.astype(dtype)


# ---------------------------------------------------------------------------
# Fused Pallas kernel: gather + mean-agg + 2x SAGEConv + classifier + log_softmax
# ---------------------------------------------------------------------------
def fused_graphsage_kernel(feats0_ref, sm0_ref, sm1_ref,
                           w0s_ref, w0n_ref, w1s_ref, w1n_ref, wf_ref,
                           out_ref, *, n1p, n2p, num_classes):
    """Entire 2-layer GraphSAGE forward in one kernel.

    Per layer:
      sm = [one_hot(cur_nodes); mean_mask]   (2*n_out_pad, n_in_pad)  bf16
      g  = sm @ feats            rows [0:n_out_pad] = x_sel, rest = agg
      feats_out = relu(x_sel @ W_self + agg @ W_neigh)   (two accumulated dots)
    Classifier: log_softmax over the first `num_classes` lanes of feats @ Wf.
    All dots are bf16 operands with f32 accumulation (MXU-native).
    """
    f32 = jnp.float32
    bf16 = jnp.bfloat16

    # ---- layer 0: fused row-gather + mean-aggregate on the MXU -------------
    g0 = jnp.dot(sm0_ref[...], feats0_ref[...],
                 preferred_element_type=f32)                    # (2*n1p, Fp)
    x0 = g0[:n1p].astype(bf16)          # split at 128 rows -> aligned free view
    a0 = g0[n1p:].astype(bf16)
    h0 = (jnp.dot(x0, w0s_ref[...], preferred_element_type=f32)
          + jnp.dot(a0, w0n_ref[...], preferred_element_type=f32))
    feats1 = jnp.maximum(h0, 0.0).astype(bf16)                  # (n1p, Fp)

    # ---- layer 1 ------------------------------------------------------------
    g1 = jnp.dot(sm1_ref[...], feats1,
                 preferred_element_type=f32)                    # (2*n2p, Fp)
    x1 = g1[:n2p].astype(bf16)          # split at multiple-of-8 rows -> aligned
    a1 = g1[n2p:].astype(bf16)
    h1 = (jnp.dot(x1, w1s_ref[...], preferred_element_type=f32)
          + jnp.dot(a1, w1n_ref[...], preferred_element_type=f32))
    feats2 = jnp.maximum(h1, 0.0).astype(bf16)                  # (n2p, Fp)

    # ---- classifier + padded-lane-aware log_softmax -------------------------
    logits = jnp.dot(feats2, wf_ref[...],
                     preferred_element_type=f32)                # (n2p, Cp)
    col = jax.lax.broadcasted_iota(jnp.int32, logits.shape, 1)
    valid = col < num_classes
    neg = jnp.float32(-1e30)
    logits = jnp.where(valid, logits, neg)
    m = jnp.max(logits, axis=1, keepdims=True)
    z = logits - m
    lse = jnp.log(jnp.sum(jnp.exp(z), axis=1, keepdims=True))
    out_ref[...] = jnp.where(valid, z - lse, neg)               # lane-dense store


# ---------------------------------------------------------------------------
# Host-side wrappers
# ---------------------------------------------------------------------------
_VMEM = pl.BlockSpec(memory_space=pltpu.MemorySpace.VMEM)


def prepare_params(conv_weights, final_weight):
    """One-time weight padding + bf16 cast (hoisted out of the per-call path)."""
    (w0s, w0n), (w1s, w1n) = conv_weights
    return dict(
        w0s=_pad2d(w0s, LANE, LANE, jnp.bfloat16),
        w0n=_pad2d(w0n, LANE, LANE, jnp.bfloat16),
        w1s=_pad2d(w1s, LANE, LANE, jnp.bfloat16),
        w1n=_pad2d(w1n, LANE, LANE, jnp.bfloat16),
        wf=_pad2d(final_weight, LANE, LANE, jnp.bfloat16),
        num_classes=int(final_weight.shape[1]),
    )


def graphsage_forward(in_features, layer_nodes, layer_masks, params):
    """Mirrors GraphSAGE.forward for a 2-conv-layer model.

    in_features : (N, F0) full node feature table
    layer_nodes : [ids_L0 (global), idx_L1 (local into L0), idx_L2 (local into L1)]
    layer_masks : [mask_0 (n1, n0), mask_1 (n2, n1)]  row-normalized (mean agg)
    params      : output of prepare_params (pre-padded bf16 weights)
    """
    ids_l0, idx_l1, idx_l2 = layer_nodes
    mask0, mask1 = layer_masks

    n0, n1, n2 = int(ids_l0.shape[0]), int(idx_l1.shape[0]), int(idx_l2.shape[0])
    n0p = _round_up(n0, LANE)      # K / lane dim of layer-0 gather+aggregate
    n1p = _round_up(n1, LANE)      # rows of feats1 == K / lane dim of layer 1
    n2p = _round_up(n2, SUBLANE)   # output rows: keep sublane splits aligned
    C = params["num_classes"]

    # Host glue (pure indexing, same as torch's self.in_features[nodes]).
    feats0_p = _pad2d(in_features[ids_l0], n0p, LANE, jnp.bfloat16)   # (n0p, Fp)

    # Fused gather+aggregate operand: one-hot row selection stacked on the
    # row-normalized mean mask; 0/1 one-hot is exact in bf16, mean weights
    # lose <0.4% relative.  Zero padding contributes nothing numerically.
    # TODO(synk): at real fanouts replace the one-hot matmul with a
    # PrefetchScalarGridSpec scalar-prefetch DMA row gather (O(n*F) bytes
    # instead of O(n*n_in) bytes/FLOPs).
    sel1 = _pad2d(jax.nn.one_hot(idx_l1, n0p, dtype=jnp.float32),
                  n1p, n0p, jnp.bfloat16)
    msk0 = _pad2d(mask0, n1p, n0p, jnp.bfloat16)
    sm0 = jnp.concatenate([sel1, msk0], axis=0)                       # (2*n1p, n0p)

    sel2 = _pad2d(jax.nn.one_hot(idx_l2, n1p, dtype=jnp.float32),
                  n2p, n1p, jnp.bfloat16)
    msk1 = _pad2d(mask1, n2p, n1p, jnp.bfloat16)
    sm1 = jnp.concatenate([sel2, msk1], axis=0)                       # (2*n2p, n1p)

    kernel = functools.partial(fused_graphsage_kernel,
                               n1p=n1p, n2p=n2p, num_classes=C)
    out_padded = pl.pallas_call(
        kernel,
        out_shape=jax.ShapeDtypeStruct((n2p, LANE), jnp.float32),
        in_specs=[_VMEM] * 8,
        out_specs=_VMEM,
        # TODO(synk): batch many sampled subgraphs per call and add a row-tiled
        # grid with dimension_semantics=("parallel", ...) so M >= 128/256 and
        # both v7x TensorCores are used; K-tile the (2*n1p, n0p) aggregation
        # with an "arbitrary" axis + VMEM accumulator (vmem_limit_bytes sized
        # for v7x's 64 MiB) once real fanouts outgrow VMEM.
    )(feats0_p, sm0, sm1, params["w0s"], params["w0n"],
      params["w1s"], params["w1n"], params["wf"])
    return out_padded[:n2, :C]


def xavier_uniform(key, shape):
    fan_in, fan_out = shape[0], shape[1]
    bound = (6.0 / (fan_in + fan_out)) ** 0.5
    return jax.random.uniform(key, shape, jnp.float32, minval=-bound, maxval=bound)


# ---------------------------------------------------------------------------
# Main: deterministic synthetic graph + params, plus a pure-JAX reference check
# ---------------------------------------------------------------------------
if __name__ == "__main__":
    key = jax.random.PRNGKey(0)
    ks = jax.random.split(key, 9)

    # layers = [F0, F1, F2, C]  ->  num_layers = 2
    F0, F1, F2, C = 16, 32, 32, 8
    N_total = 100            # total nodes in the graph feature table
    n0, n1, n2 = 64, 24, 8   # sampled neighborhood sizes (outer -> batch)

    in_features = jax.random.normal(ks[0], (N_total, F0), jnp.float32)

    # Synthetic Sampler output.
    # TODO(synk): the real Sampler walks adj_lists host-side; we build a
    # deterministic synthetic neighborhood structure instead.
    ids_l0 = jax.random.randint(ks[1], (n0,), 0, N_total)        # global ids
    idx_l1 = jax.random.randint(ks[2], (n1,), 0, n0)             # local into L0
    idx_l2 = jax.random.randint(ks[3], (n2,), 0, n1)             # local into L1
    layer_nodes = [ids_l0, idx_l1, idx_l2]

    def make_mask(k, rows, cols):
        m = (jax.random.uniform(k, (rows, cols)) < 0.25).astype(jnp.float32)
        m = m.at[:, 0].set(1.0)   # deg >= 1 per row (avoids 0/0 NaN)
        return m / jnp.sum(m, axis=1, keepdims=True)

    mask0 = make_mask(ks[4], n1, n0)
    mask1 = make_mask(ks[5], n2, n1)
    layer_masks = [mask0, mask1]

    w0 = xavier_uniform(ks[6], (2 * F0, F1))
    w1 = xavier_uniform(ks[7], (2 * F1, F2))
    conv_weights = [(w0[:F0], w0[F0:]), (w1[:F1], w1[F1:])]
    final_weight = xavier_uniform(ks[8], (F2, C))

    params = prepare_params(conv_weights, final_weight)   # one-time, not per call
    out = graphsage_forward(in_features, layer_nodes, layer_masks, params)
    out = jax.block_until_ready(out)

    # Pure-JAX f32 reference of the same forward pass.
    def reference(in_features, layer_nodes, layer_masks, conv_weights, final_w):
        feats = in_features[layer_nodes[0]]
        for i, (ws, wn) in enumerate(conv_weights):
            cur = layer_nodes[i + 1]
            agg = layer_masks[i] @ feats
            feats = jax.nn.relu(feats[cur] @ ws + agg @ wn)
        return jax.nn.log_softmax(feats @ final_w, axis=1)

    ref = reference(in_features, layer_nodes, layer_masks, conv_weights,
                    final_weight)

    assert out.shape == (n2, C)
    assert jnp.allclose(jnp.sum(jnp.exp(out), axis=1), 1.0, atol=1e-3)
    max_err = float(jnp.max(jnp.abs(out - ref)))
    assert max_err < 1e-1, f"max abs error vs reference: {max_err}"

    print("KERNEL_OK")
</pallas_src>

<mosaic_0001>
module attributes {stable_mosaic.version = 11 : i64} {
  func.func @fused_graphsage_kernel(%arg0: memref<128x128xbf16, #tpu.memory_space<vmem>>, %arg1: memref<256x128xbf16, #tpu.memory_space<vmem>>, %arg2: memref<16x128xbf16, #tpu.memory_space<vmem>>, %arg3: memref<128x128xbf16, #tpu.memory_space<vmem>>, %arg4: memref<128x128xbf16, #tpu.memory_space<vmem>>, %arg5: memref<128x128xbf16, #tpu.memory_space<vmem>>, %arg6: memref<128x128xbf16, #tpu.memory_space<vmem>>, %arg7: memref<128x128xbf16, #tpu.memory_space<vmem>>, %arg8: memref<8x128xf32, #tpu.memory_space<vmem>>) attributes {dimension_semantics = [], scalar_prefetch = 0 : i64, scratch_operands = 0 : i64, tpu.core_type = #tpu.core_type<tc>} {
    %c0 = arith.constant 0 : index
    %c0_0 = arith.constant 0 : index
    %0 = vector.load %arg1[%c0, %c0_0] : memref<256x128xbf16, #tpu.memory_space<vmem>>, vector<256x128xbf16>
    %c0_1 = arith.constant 0 : index
    %c0_2 = arith.constant 0 : index
    %1 = vector.load %arg0[%c0_1, %c0_2] : memref<128x128xbf16, #tpu.memory_space<vmem>>, vector<128x128xbf16>
    %cst = arith.constant dense<0.000000e+00> : vector<256x128xf32>
    %2 = tpu.matmul %0, %1, %cst {dimension_numbers = #tpu.dot_dimension_numbers<[1], [0], [0], [1], [0, 0, 1, 1], [], []>} : vector<256x128xbf16>, vector<128x128xbf16>, vector<256x128xf32> -> vector<256x128xf32>
    %3 = vector.extract_strided_slice %2 {offsets = [0, 0], sizes = [128, 128], strides = [1, 1]} : vector<256x128xf32> to vector<128x128xf32>
    %4 = arith.truncf %3 : vector<128x128xf32> to vector<128x128xbf16>
    %5 = vector.extract_strided_slice %2 {offsets = [128, 0], sizes = [128, 128], strides = [1, 1]} : vector<256x128xf32> to vector<128x128xf32>
    %6 = arith.truncf %5 : vector<128x128xf32> to vector<128x128xbf16>
    %c0_3 = arith.constant 0 : index
    %c0_4 = arith.constant 0 : index
    %7 = vector.load %arg3[%c0_3, %c0_4] : memref<128x128xbf16, #tpu.memory_space<vmem>>, vector<128x128xbf16>
    %cst_5 = arith.constant dense<0.000000e+00> : vector<128x128xf32>
    %8 = tpu.matmul %4, %7, %cst_5 {dimension_numbers = #tpu.dot_dimension_numbers<[1], [0], [0], [1], [0, 0, 1, 1], [], []>} : vector<128x128xbf16>, vector<128x128xbf16>, vector<128x128xf32> -> vector<128x128xf32>
    %c0_6 = arith.constant 0 : index
    %c0_7 = arith.constant 0 : index
    %9 = vector.load %arg4[%c0_6, %c0_7] : memref<128x128xbf16, #tpu.memory_space<vmem>>, vector<128x128xbf16>
    %cst_8 = arith.constant dense<0.000000e+00> : vector<128x128xf32>
    %10 = tpu.matmul %6, %9, %cst_8 {dimension_numbers = #tpu.dot_dimension_numbers<[1], [0], [0], [1], [0, 0, 1, 1], [], []>} : vector<128x128xbf16>, vector<128x128xbf16>, vector<128x128xf32> -> vector<128x128xf32>
    %11 = arith.addf %8, %10 : vector<128x128xf32>
    %cst_9 = arith.constant 0.000000e+00 : f32
    %12 = vector.broadcast %cst_9 : f32 to vector<128x128xf32>
    %13 = arith.maximumf %11, %12 : vector<128x128xf32>
    %14 = arith.truncf %13 : vector<128x128xf32> to vector<128x128xbf16>
    %c0_10 = arith.constant 0 : index
    %c0_11 = arith.constant 0 : index
    %15 = vector.load %arg2[%c0_10, %c0_11] : memref<16x128xbf16, #tpu.memory_space<vmem>>, vector<16x128xbf16>
    %cst_12 = arith.constant dense<0.000000e+00> : vector<16x128xf32>
    %16 = tpu.matmul %15, %14, %cst_12 {dimension_numbers = #tpu.dot_dimension_numbers<[1], [0], [0], [1], [0, 0, 1, 1], [], []>} : vector<16x128xbf16>, vector<128x128xbf16>, vector<16x128xf32> -> vector<16x128xf32>
    %17 = vector.extract_strided_slice %16 {offsets = [0, 0], sizes = [8, 128], strides = [1, 1]} : vector<16x128xf32> to vector<8x128xf32>
    %18 = arith.truncf %17 : vector<8x128xf32> to vector<8x128xbf16>
    %19 = vector.extract_strided_slice %16 {offsets = [8, 0], sizes = [8, 128], strides = [1, 1]} : vector<16x128xf32> to vector<8x128xf32>
    %20 = arith.truncf %19 : vector<8x128xf32> to vector<8x128xbf16>
    %c0_13 = arith.constant 0 : index
    %c0_14 = arith.constant 0 : index
    %21 = vector.load %arg5[%c0_13, %c0_14] : memref<128x128xbf16, #tpu.memory_space<vmem>>, vector<128x128xbf16>
    %cst_15 = arith.constant dense<0.000000e+00> : vector<8x128xf32>
    %22 = tpu.matmul %18, %21, %cst_15 {dimension_numbers = #tpu.dot_dimension_numbers<[1], [0], [0], [1], [0, 0, 1, 1], [], []>} : vector<8x128xbf16>, vector<128x128xbf16>, vector<8x128xf32> -> vector<8x128xf32>
    %c0_16 = arith.constant 0 : index
    %c0_17 = arith.constant 0 : index
    %23 = vector.load %arg6[%c0_16, %c0_17] : memref<128x128xbf16, #tpu.memory_space<vmem>>, vector<128x128xbf16>
    %cst_18 = arith.constant dense<0.000000e+00> : vector<8x128xf32>
    %24 = tpu.matmul %20, %23, %cst_18 {dimension_numbers = #tpu.dot_dimension_numbers<[1], [0], [0], [1], [0, 0, 1, 1], [], []>} : vector<8x128xbf16>, vector<128x128xbf16>, vector<8x128xf32> -> vector<8x128xf32>
    %25 = arith.addf %22, %24 : vector<8x128xf32>
    %cst_19 = arith.constant 0.000000e+00 : f32
    %26 = vector.broadcast %cst_19 : f32 to vector<8x128xf32>
    %27 = arith.maximumf %25, %26 : vector<8x128xf32>
    %28 = arith.truncf %27 : vector<8x128xf32> to vector<8x128xbf16>
    %c0_20 = arith.constant 0 : index
    %c0_21 = arith.constant 0 : index
    %29 = vector.load %arg7[%c0_20, %c0_21] : memref<128x128xbf16, #tpu.memory_space<vmem>>, vector<128x128xbf16>
    %cst_22 = arith.constant dense<0.000000e+00> : vector<8x128xf32>
    %30 = tpu.matmul %28, %29, %cst_22 {dimension_numbers = #tpu.dot_dimension_numbers<[1], [0], [0], [1], [0, 0, 1, 1], [], []>} : vector<8x128xbf16>, vector<128x128xbf16>, vector<8x128xf32> -> vector<8x128xf32>
    %31 = tpu.iota {dimensions = array<i32: 1>} : vector<8x128xi32>
    %c8_i32 = arith.constant 8 : i32
    %32 = vector.broadcast %c8_i32 : i32 to vector<8x128xi32>
    %33 = arith.cmpi slt, %31, %32 : vector<8x128xi32>
    %cst_23 = arith.constant -1.000000e+30 : f32
    %34 = vector.broadcast %cst_23 : f32 to vector<8x128xf32>
    %35 = arith.select %33, %30, %34 : vector<8x128xi1>, vector<8x128xf32>
    %cst_24 = arith.constant dense<0xFF800000> : vector<8xf32>
    %36 = vector.multi_reduction <maximumf>, %35, %cst_24 [1] : vector<8x128xf32> to vector<8xf32>
    %37 = vector.shape_cast %36 : vector<8xf32> to vector<8x1xf32>
    %38 = vector.broadcast %37 : vector<8x1xf32> to vector<8x128xf32>
    %39 = arith.subf %35, %38 : vector<8x128xf32>
    %40 = math.exp %39 : vector<8x128xf32>
    %cst_25 = arith.constant dense<0.000000e+00> : vector<8xf32>
    %41 = vector.multi_reduction <add>, %40, %cst_25 [1] : vector<8x128xf32> to vector<8xf32>
    %42 = vector.shape_cast %41 : vector<8xf32> to vector<8x1xf32>
    %43 = math.log %42 : vector<8x1xf32>
    %44 = vector.broadcast %43 : vector<8x1xf32> to vector<8x128xf32>
    %45 = arith.subf %39, %44 : vector<8x128xf32>
    %cst_26 = arith.constant -1.000000e+30 : f32
    %46 = vector.broadcast %cst_26 : f32 to vector<8x128xf32>
    %47 = arith.select %33, %45, %46 : vector<8x128xi1>, vector<8x128xf32>
    %c0_27 = arith.constant 0 : index
    %c0_28 = arith.constant 0 : index
    %48 = vector.load %arg8[%c0_27, %c0_28] : memref<8x128xf32, #tpu.memory_space<vmem>>, vector<8x128xf32>
    tpu.vector_store %arg8[%c0_27, %c0_28], %47 {strides = array<i32>} : memref<8x128xf32, #tpu.memory_space<vmem>>, vector<8x128xf32>,
    return
  }
}

</mosaic_0001>

<llo_original>
// kernel: tpu_custom_call.1
$region0: #{tpu_custom_call.1}
  #allocation0 [shape = 'u32[]', space=smem, size = 0x4, offset = 0x4, fixed_abs, tag = 'smem constant byte address 0x4 - core index']
  #allocation1 [shape = 'u32[144,128]{1,0:T(1,128)}', space=vmem, size = 0x12000, scoped, tag = 'internal scratch']
  %s0 = inlined_call_operand.hbm [shape: bf16[128,128], index: 0, kind: input, shape index: {}]
  %s1 = inlined_call_operand.hbm [shape: bf16[256,128], index: 1, kind: input, shape index: {}]
  %s2 = inlined_call_operand.hbm [shape: bf16[16,128], index: 2, kind: input, shape index: {}]
  %s3 = inlined_call_operand.hbm [shape: bf16[128,128], index: 3, kind: input, shape index: {}]
  %s4 = inlined_call_operand.hbm [shape: bf16[128,128], index: 4, kind: input, shape index: {}]
  %s5 = inlined_call_operand.hbm [shape: bf16[128,128], index: 5, kind: input, shape index: {}]
  %s6 = inlined_call_operand.hbm [shape: bf16[128,128], index: 6, kind: input, shape index: {}]
  %s7 = inlined_call_operand.hbm [shape: bf16[128,128], index: 7, kind: input, shape index: {}]
  %s8 = inlined_call_operand.hbm [shape: f32[8,128], index: 8, kind: output, shape index: {}]
  %s9 = sld [smem:[#allocation0]]
  $region74: #{tpu_custom_call.1} parent=0
    _
  %s11 = ssub.s32 1, %s9
  %s12 = scalar_select 0, %s11, %s9
  $region1: #{tpu_custom_call.1} parent=0
    #allocation2 [shape = 'u8[32768]{0}', space=vmem, size = 0x8000, scoped, tag = 'input window, operand 0, single buffered']
    #allocation3 [shape = 's32[1]{0}', space=sflag, size = 0x4, scoped, tag = 'scoped memory for tpu_custom_call.1']
    #allocation4 [shape = 's32[1]{0}', space=sflag, size = 0x4, scoped, tag = 'scoped memory for tpu_custom_call.1']
    #allocation5 [shape = 'u8[65536]{0}', space=vmem, size = 0x10000, scoped, tag = 'input window, operand 1, single buffered']
    #allocation6 [shape = 's32[1]{0}', space=sflag, size = 0x4, scoped, tag = 'scoped memory for tpu_custom_call.1']
    #allocation7 [shape = 'u8[4096]{0}', space=vmem, size = 0x1000, scoped, tag = 'input window, operand 2, single buffered']
    #allocation8 [shape = 'u8[32768]{0}', space=vmem, size = 0x8000, scoped, tag = 'input window, operand 3, single buffered']
    #allocation9 [shape = 's32[1]{0}', space=sflag, size = 0x4, scoped, tag = 'scoped memory for tpu_custom_call.1']
    #allocation10 [shape = 'u8[32768]{0}', space=vmem, size = 0x8000, scoped, tag = 'input window, operand 4, single buffered']
    #allocation11 [shape = 'u8[32768]{0}', space=vmem, size = 0x8000, scoped, tag = 'input window, operand 5, single buffered']
    #allocation12 [shape = 's32[1]{0}', space=sflag, size = 0x4, scoped, tag = 'scoped memory for tpu_custom_call.1']
    #allocation13 [shape = 'u8[32768]{0}', space=vmem, size = 0x8000, scoped, tag = 'input window, operand 6, single buffered']
    #allocation14 [shape = 'u8[32768]{0}', space=vmem, size = 0x8000, scoped, tag = 'input window, operand 7, single buffered']
    #allocation15 [shape = 's32[1]{0}', space=sflag, size = 0x4, scoped, tag = 'scoped memory for tpu_custom_call.1']
    #allocation16 [shape = 'u8[4096]{0}', space=vmem, size = 0x1000, scoped, tag = 'output window, operand 0, single buffered']
    %13 = vsyncpa [#allocation3], 0
    %14 = vsyncpa [#allocation6], 0
    %15 = vsyncpa [#allocation9], 0
    %16 = vsyncpa [#allocation12], 0
    %17 = vsyncpa [#allocation15], 0
    %18 = vsyncpa [#allocation4], 0
    // Predicated region
    $region2: #{tpu_custom_call.1} parent=1 // pred_check
      _
    $region3: #{tpu_custom_call.1} parent=1 // pred_check_branch
      %20 = sbr.rel (0) target = $region5
    $region4: #{tpu_custom_call.1} parent=1 // pred_region
      %s22 = ssub.s32 1024, 1024
      %23 = vsyncadd [#allocation3], %s22
      %s24 = sshll.u32 [#allocation2], 4
      %s25 = int_to_ptr.vmem [resolvable:$true] %s24
      %30 = dma.hbm_to_vmem [thread:$0]  %s0, 1024, %s25, [#allocation3], 64, 64, 4
    $region5: #{tpu_custom_call.1} parent=1 // pred_fallthru
      _
    // Predicated region
    $region6: #{tpu_custom_call.1} parent=1 // pred_check
      _
    $region7: #{tpu_custom_call.1} parent=1 // pred_check_branch
      %32 = sbr.rel (0) target = $region9
    $region8: #{tpu_custom_call.1} parent=1 // pred_region
      %s34 = ssub.s32 2048, 2048
      %35 = vsyncadd [#allocation6], %s34
      %s36 = sshll.u32 [#allocation5], 4
      %s37 = int_to_ptr.vmem [resolvable:$true] %s36
      %42 = dma.hbm_to_vmem [thread:$0]  %s1, 2048, %s37, [#allocation6], 64, 64, 4
    $region9: #{tpu_custom_call.1} parent=1 // pred_fallthru
      _
    // Predicated region
    $region10: #{tpu_custom_call.1} parent=1 // pred_check
      _
    $region11: #{tpu_custom_call.1} parent=1 // pred_check_branch
      %44 = sbr.rel (0) target = $region13
    $region12: #{tpu_custom_call.1} parent=1 // pred_region
      %s46 = ssub.s32 128, 128
      %47 = vsyncadd [#allocation6], %s46
      %s48 = sshll.u32 [#allocation7], 4
      %s49 = int_to_ptr.vmem [resolvable:$true] %s48
      %54 = dma.hbm_to_vmem [thread:$0]  %s2, 128, %s49, [#allocation6], 64, 64, 4
    $region13: #{tpu_custom_call.1} parent=1 // pred_fallthru
      _
    // Predicated region
    $region14: #{tpu_custom_call.1} parent=1 // pred_check
      _
    $region15: #{tpu_custom_call.1} parent=1 // pred_check_branch
      %56 = sbr.rel (0) target = $region17
    $region16: #{tpu_custom_call.1} parent=1 // pred_region
      %s58 = ssub.s32 1024, 1024
      %59 = vsyncadd [#allocation9], %s58
      %s60 = sshll.u32 [#allocation8], 4
      %s61 = int_to_ptr.vmem [resolvable:$true] %s60
      %66 = dma.hbm_to_vmem [thread:$0]  %s3, 1024, %s61, [#allocation9], 64, 64, 4
    $region17: #{tpu_custom_call.1} parent=1 // pred_fallthru
      _
    // Predicated region
    $region18: #{tpu_custom_call.1} parent=1 // pred_check
      _
    $region19: #{tpu_custom_call.1} parent=1 // pred_check_branch
      %68 = sbr.rel (0) target = $region21
    $region20: #{tpu_custom_call.1} parent=1 // pred_region
      %s70 = ssub.s32 1024, 1024
      %71 = vsyncadd [#allocation9], %s70
      %s72 = sshll.u32 [#allocation10], 4
      %s73 = int_to_ptr.vmem [resolvable:$true] %s72
      %78 = dma.hbm_to_vmem [thread:$0]  %s4, 1024, %s73, [#allocation9], 64, 64, 4
    $region21: #{tpu_custom_call.1} parent=1 // pred_fallthru
      _
    // Predicated region
    $region22: #{tpu_custom_call.1} parent=1 // pred_check
      _
    $region23: #{tpu_custom_call.1} parent=1 // pred_check_branch
      %80 = sbr.rel (0) target = $region25
    $region24: #{tpu_custom_call.1} parent=1 // pred_region
      %s82 = ssub.s32 1024, 1024
      %83 = vsyncadd [#allocation12], %s82
      %s84 = sshll.u32 [#allocation11], 4
      %s85 = int_to_ptr.vmem [resolvable:$true] %s84
      %90 = dma.hbm_to_vmem [thread:$0]  %s5, 1024, %s85, [#allocation12], 64, 64, 4
    $region25: #{tpu_custom_call.1} parent=1 // pred_fallthru
      _
    // Predicated region
    $region26: #{tpu_custom_call.1} parent=1 // pred_check
      _
    $region27: #{tpu_custom_call.1} parent=1 // pred_check_branch
      %92 = sbr.rel (0) target = $region29
    $region28: #{tpu_custom_call.1} parent=1 // pred_region
      %s94 = ssub.s32 1024, 1024
      %95 = vsyncadd [#allocation12], %s94
      %s96 = sshll.u32 [#allocation13], 4
      %s97 = int_to_ptr.vmem [resolvable:$true] %s96
      %102 = dma.hbm_to_vmem [thread:$0]  %s6, 1024, %s97, [#allocation12], 64, 64, 4
    $region29: #{tpu_custom_call.1} parent=1 // pred_fallthru
      _
    // Predicated region
    $region30: #{tpu_custom_call.1} parent=1 // pred_check
      _
    $region31: #{tpu_custom_call.1} parent=1 // pred_check_branch
      %104 = sbr.rel (0) target = $region33
    $region32: #{tpu_custom_call.1} parent=1 // pred_region
      %s106 = ssub.s32 1024, 1024
      %107 = vsyncadd [#allocation15], %s106
      %s108 = sshll.u32 [#allocation14], 4
      %s109 = int_to_ptr.vmem [resolvable:$true] %s108
      %114 = dma.hbm_to_vmem [thread:$0]  %s7, 1024, %s109, [#allocation15], 64, 64, 4
    $region33: #{tpu_custom_call.1} parent=1 // pred_fallthru
      _
    // Predicated region
    $region34: #{tpu_custom_call.1} parent=1 // pred_check
      _
    $region35: #{tpu_custom_call.1} parent=1 // pred_check_branch
      %116 = sbr.rel (0) target = $region37
    $region36: #{tpu_custom_call.1} parent=1 // pred_region
      %117 = dma.done [#allocation3], 1024
    $region37: #{tpu_custom_call.1} parent=1 // pred_fallthru
      _
    // Predicated region
    $region38: #{tpu_custom_call.1} parent=1 // pred_check
      _
    $region39: #{tpu_custom_call.1} parent=1 // pred_check_branch
      %119 = sbr.rel (0) target = $region41
    $region40: #{tpu_custom_call.1} parent=1 // pred_region
      %120 = dma.done [#allocation6], 2048
    $region41: #{tpu_custom_call.1} parent=1 // pred_fallthru
      _
    // Predicated region
    $region42: #{tpu_custom_call.1} parent=1 // pred_check
      _
    $region43: #{tpu_custom_call.1} parent=1 // pred_check_branch
      %122 = sbr.rel (0) target = $region45
    $region44: #{tpu_custom_call.1} parent=1 // pred_region
      %123 = dma.done [#allocation6], 128
    $region45: #{tpu_custom_call.1} parent=1 // pred_fallthru
      _
    // Predicated region
    $region46: #{tpu_custom_call.1} parent=1 // pred_check
      _
    $region47: #{tpu_custom_call.1} parent=1 // pred_check_branch
      %125 = sbr.rel (0) target = $region49
    $region48: #{tpu_custom_call.1} parent=1 // pred_region
      %126 = dma.done [#allocation9], 1024
    $region49: #{tpu_custom_call.1} parent=1 // pred_fallthru
      _
    // Predicated region
    $region50: #{tpu_custom_call.1} parent=1 // pred_check
      _
    $region51: #{tpu_custom_call.1} parent=1 // pred_check_branch
      %128 = sbr.rel (0) target = $region53
    $region52: #{tpu_custom_call.1} parent=1 // pred_region
      %129 = dma.done [#allocation9], 1024
    $region53: #{tpu_custom_call.1} parent=1 // pred_fallthru
      _
    // Predicated region
    $region54: #{tpu_custom_call.1} parent=1 // pred_check
      _
    $region55: #{tpu_custom_call.1} parent=1 // pred_check_branch
      %131 = sbr.rel (0) target = $region57
    $region56: #{tpu_custom_call.1} parent=1 // pred_region
      %132 = dma.done [#allocation12], 1024
    $region57: #{tpu_custom_call.1} parent=1 // pred_fallthru
      _
    // Predicated region
    $region58: #{tpu_custom_call.1} parent=1 // pred_check
      _
    $region59: #{tpu_custom_call.1} parent=1 // pred_check_branch
      %134 = sbr.rel (0) target = $region61
    $region60: #{tpu_custom_call.1} parent=1 // pred_region
      %135 = dma.done [#allocation12], 1024
    $region61: #{tpu_custom_call.1} parent=1 // pred_fallthru
      _
    // Predicated region
    $region62: #{tpu_custom_call.1} parent=1 // pred_check
      _
    $region63: #{tpu_custom_call.1} parent=1 // pred_check_branch
      %137 = sbr.rel (0) target = $region65
    $region64: #{tpu_custom_call.1} parent=1 // pred_region
      %138 = dma.done [#allocation15], 1024
    $region65: #{tpu_custom_call.1} parent=1 // pred_fallthru
      _
    %v140 = vld [vmem:[#allocation5] sm:$0xf]
    %v141 = vld [vmem:[#allocation5 + $0x4] sm:$0xf]
    %v142 = vld [vmem:[#allocation5 + $0x8] sm:$0xf]
    %v143 = vld [vmem:[#allocation5 + $0xc] sm:$0xf]
    %v144 = vld [vmem:[#allocation5 + $0x10] sm:$0xf]
    %v145 = vld [vmem:[#allocation5 + $0x14] sm:$0xf]
    %v146 = vld [vmem:[#allocation5 + $0x18] sm:$0xf]
    %v147 = vld [vmem:[#allocation5 + $0x1c] sm:$0xf]
    %v148 = vld [vmem:[#allocation5 + $0x20] sm:$0xf]
    %v149 = vld [vmem:[#allocation5 + $0x24] sm:$0xf]
    %v150 = vld [vmem:[#allocation5 + $0x28] sm:$0xf]
    %v151 = vld [vmem:[#allocation5 + $0x2c] sm:$0xf]
    %v152 = vld [vmem:[#allocation5 + $0x30] sm:$0xf]
    %v153 = vld [vmem:[#allocation5 + $0x34] sm:$0xf]
    %v154 = vld [vmem:[#allocation5 + $0x38] sm:$0xf]
    %v155 = vld [vmem:[#allocation5 + $0x3c] sm:$0xf]
    %v156 = vld [vmem:[#allocation5 + $0x40] sm:$0xf]
    %v157 = vld [vmem:[#allocation5 + $0x44] sm:$0xf]
    %v158 = vld [vmem:[#allocation5 + $0x48] sm:$0xf]
    %v159 = vld [vmem:[#allocation5 + $0x4c] sm:$0xf]
    %v160 = vld [vmem:[#allocation5 + $0x50] sm:$0xf]
    %v161 = vld [vmem:[#allocation5 + $0x54] sm:$0xf]
    %v162 = vld [vmem:[#allocation5 + $0x58] sm:$0xf]
    %v163 = vld [vmem:[#allocation5 + $0x5c] sm:$0xf]
    %v164 = vld [vmem:[#allocation5 + $0x60] sm:$0xf]
    %v165 = vld [vmem:[#allocation5 + $0x64] sm:$0xf]
    %v166 = vld [vmem:[#allocation5 + $0x68] sm:$0xf]
    %v167 = vld [vmem:[#allocation5 + $0x6c] sm:$0xf]
    %v168 = vld [vmem:[#allocation5 + $0x70] sm:$0xf]
    %v169 = vld [vmem:[#allocation5 + $0x74] sm:$0xf]
    %v170 = vld [vmem:[#allocation5 + $0x78] sm:$0xf]
    %v171 = vld [vmem:[#allocation5 + $0x7c] sm:$0xf]
    %v172 = vld [vmem:[#allocation2] sm:$0xf]
    %v173 = vld [vmem:[#allocation2 + $0x4] sm:$0xf]
    %v174 = vld [vmem:[#allocation2 + $0x8] sm:$0xf]
    %v175 = vld [vmem:[#allocation2 + $0xc] sm:$0xf]
    %v176 = vld [vmem:[#allocation2 + $0x10] sm:$0xf]
    %v177 = vld [vmem:[#allocation2 + $0x14] sm:$0xf]
    %v178 = vld [vmem:[#allocation2 + $0x18] sm:$0xf]
    %v179 = vld [vmem:[#allocation2 + $0x1c] sm:$0xf]
    %v180 = vld [vmem:[#allocation2 + $0x20] sm:$0xf]
    %v181 = vld [vmem:[#allocation2 + $0x24] sm:$0xf]
    %v182 = vld [vmem:[#allocation2 + $0x28] sm:$0xf]
    %v183 = vld [vmem:[#allocation2 + $0x2c] sm:$0xf]
    %v184 = vld [vmem:[#allocation2 + $0x30] sm:$0xf]
    %v185 = vld [vmem:[#allocation2 + $0x34] sm:$0xf]
    %v186 = vld [vmem:[#allocation2 + $0x38] sm:$0xf]
    %v187 = vld [vmem:[#allocation2 + $0x3c] sm:$0xf]
    %v220 = vunpack.c.l.b16 %v140
    %v221 = vunpack.c.l.b16 %v141
    %v222 = vunpack.c.l.b16 %v142
    %v223 = vunpack.c.l.b16 %v143
    %v224 = vunpack.c.l.b16 %v144
    %v225 = vunpack.c.l.b16 %v145
    %v226 = vunpack.c.l.b16 %v146
    %v227 = vunpack.c.l.b16 %v147
    %v228 = vunpack.c.l.b16 %v148
    %v229 = vunpack.c.l.b16 %v149
    %v230 = vunpack.c.l.b16 %v150
    %v231 = vunpack.c.l.b16 %v151
    %v232 = vunpack.c.l.b16 %v152
    %v233 = vunpack.c.l.b16 %v153
    %v234 = vunpack.c.l.b16 %v154
    %v235 = vunpack.c.l.b16 %v155
    %v236 = vunpack.c.l.b16 %v156
    %v237 = vunpack.c.l.b16 %v157
    %v238 = vunpack.c.l.b16 %v158
    %v239 = vunpack.c.l.b16 %v159
    %v240 = vunpack.c.l.b16 %v160
    %v241 = vunpack.c.l.b16 %v161
    %v242 = vunpack.c.l.b16 %v162
    %v243 = vunpack.c.l.b16 %v163
    %v244 = vunpack.c.l.b16 %v164
    %v245 = vunpack.c.l.b16 %v165
    %v246 = vunpack.c.l.b16 %v166
    %v247 = vunpack.c.l.b16 %v167
    %v248 = vunpack.c.l.b16 %v168
    %v249 = vunpack.c.l.b16 %v169
    %v250 = vunpack.c.l.b16 %v170
    %v251 = vunpack.c.l.b16 %v171
    %v252 = vpack.c.b16 %v221, %v220
    %v253 = vpack.c.b16 %v223, %v222
    %v254 = vpack.c.b16 %v225, %v224
    %v255 = vpack.c.b16 %v227, %v226
    %v256 = vpack.c.b16 %v229, %v228
    %v257 = vpack.c.b16 %v231, %v230
    %v258 = vpack.c.b16 %v233, %v232
    %v259 = vpack.c.b16 %v235, %v234
    %v260 = vpack.c.b16 %v237, %v236
    %v261 = vpack.c.b16 %v239, %v238
    %v262 = vpack.c.b16 %v241, %v240
    %v263 = vpack.c.b16 %v243, %v242
    %v264 = vpack.c.b16 %v245, %v244
    %v265 = vpack.c.b16 %v247, %v246
    %v266 = vpack.c.b16 %v249, %v248
    %v267 = vpack.c.b16 %v251, %v250
    %v300 = vunpack.c.l.b16 %v172
    %v301 = vunpack.c.l.b16 %v173
    %v302 = vunpack.c.l.b16 %v174
    %v303 = vunpack.c.l.b16 %v175
    %v304 = vunpack.c.l.b16 %v176
    %v305 = vunpack.c.l.b16 %v177
    %v306 = vunpack.c.l.b16 %v178
    %v307 = vunpack.c.l.b16 %v179
    %v308 = vunpack.c.l.b16 %v180
    %v309 = vunpack.c.l.b16 %v181
    %v310 = vunpack.c.l.b16 %v182
    %v311 = vunpack.c.l.b16 %v183
    %v312 = vunpack.c.l.b16 %v184
    %v313 = vunpack.c.l.b16 %v185
    %v314 = vunpack.c.l.b16 %v186
    %v315 = vunpack.c.l.b16 %v187
    %v316 = vpack.c.b16 %v301, %v300
    %v317 = vpack.c.b16 %v303, %v302
    %v318 = vpack.c.b16 %v305, %v304
    %v319 = vpack.c.b16 %v307, %v306
    %v320 = vpack.c.b16 %v309, %v308
    %v321 = vpack.c.b16 %v311, %v310
    %v322 = vpack.c.b16 %v313, %v312
    %v323 = vpack.c.b16 %v315, %v314
    %332 = vmatprep.subr.bf16.mxu0 0
    %333 = vmatpush1.bf16.msra.mxu0 %v323
    %334 = vmatprep.subr.bf16.mxu0 0
    %335 = vmatpush1.bf16.msra.mxu0 %v322
    %336 = vmatprep.subr.bf16.mxu0 0
    %337 = vmatpush1.bf16.msra.mxu0 %v321
    %338 = vmatprep.subr.bf16.mxu0 0
    %339 = vmatpush1.bf16.msra.mxu0 %v320
    %340 = vmatprep.subr.bf16.mxu0 0
    %341 = vmatpush1.bf16.msra.mxu0 %v319
    %342 = vmatprep.subr.bf16.mxu0 0
    %343 = vmatpush1.bf16.msra.mxu0 %v318
    %344 = vmatprep.subr.bf16.mxu0 0
    %345 = vmatpush1.bf16.msra.mxu0 %v317
    %346 = vmatprep.subr.bf16.mxu0 0
    %347 = vmatpush1.bf16.msra.mxu0 %v316
    %348 = vmatprep.subr.bf16.mxu0 0
    %349 = vmatpush2.bf16.msra.mxu0 0
    %350 = vmatprep.subr.bf16.mxu0 0
    %351 = vmatpush2.bf16.msra.mxu0 0
    %352 = vmatprep.subr.bf16.mxu0 0
    %353 = vmatpush2.bf16.msra.mxu0 0
    %354 = vmatprep.subr.bf16.mxu0 0
    %355 = vmatpush2.bf16.msra.mxu0 0
    %356 = vmatprep.subr.bf16.mxu0 0
    %357 = vmatpush2.bf16.msra.mxu0 0
    %358 = vmatprep.subr.bf16.mxu0 0
    %359 = vmatpush2.bf16.msra.mxu0 0
    %360 = vmatprep.subr.bf16.mxu0 0
    %361 = vmatpush2.bf16.msra.mxu0 0
    %362 = vmatprep.subr.bf16.mxu0 0
    %363 = vmatpush2.bf16.msra.mxu0 0
    %364 = vmatprep.mubr.bf16.mxu0 0
    %365 = vmatmul.mubr.bf16.gmra.mxu0 %v252
    %v366 = vpop.f32.mrf.mxu0
    %v367 = vadd.f32 0.0, %v366
    %v368 = vpop.f32.mrf.mxu0
    %v369 = vpop.f32.mrf.mxu0
    %v370 = vadd.f32 0.0, %v369
    %v371 = vpop.f32.mrf.mxu0
    %372 = vmatprep.mubr.bf16.mxu0 0
    %373 = vmatmul.mubr.bf16.gmra.mxu0 %v253
    %v374 = vpop.f32.mrf.mxu0
    %v375 = vadd.f32 0.0, %v374
    %v376 = vpop.f32.mrf.mxu0
    %v377 = vpop.f32.mrf.mxu0
    %v378 = vadd.f32 0.0, %v377
    %v379 = vpop.f32.mrf.mxu0
    %380 = vmatprep.mubr.bf16.mxu0 0
    %381 = vmatmul.mubr.bf16.gmra.mxu0 %v254
    %v382 = vpop.f32.mrf.mxu0
    %v383 = vadd.f32 0.0, %v382
    %v384 = vpop.f32.mrf.mxu0
    %v385 = vpop.f32.mrf.mxu0
    %v386 = vadd.f32 0.0, %v385
    %v387 = vpop.f32.mrf.mxu0
    %388 = vmatprep.mubr.bf16.mxu0 0
    %389 = vmatmul.mubr.bf16.gmra.mxu0 %v255
    %v390 = vpop.f32.mrf.mxu0
    %v391 = vadd.f32 0.0, %v390
    %v392 = vpop.f32.mrf.mxu0
    %v393 = vpop.f32.mrf.mxu0
    %v394 = vadd.f32 0.0, %v393
    %v395 = vpop.f32.mrf.mxu0
    %396 = vmatprep.mubr.bf16.mxu0 0
    %397 = vmatmul.mubr.bf16.gmra.mxu0 %v256
    %v398 = vpop.f32.mrf.mxu0
    %v399 = vadd.f32 0.0, %v398
    %v400 = vpop.f32.mrf.mxu0
    %v401 = vpop.f32.mrf.mxu0
    %v402 = vadd.f32 0.0, %v401
    %v403 = vpop.f32.mrf.mxu0
    %404 = vmatprep.mubr.bf16.mxu0 0
    %405 = vmatmul.mubr.bf16.gmra.mxu0 %v257
    %v406 = vpop.f32.mrf.mxu0
    %v407 = vadd.f32 0.0, %v406
    %v408 = vpop.f32.mrf.mxu0
    %v409 = vpop.f32.mrf.mxu0
    %v410 = vadd.f32 0.0, %v409
    %v411 = vpop.f32.mrf.mxu0
    %412 = vmatprep.mubr.bf16.mxu0 0
    %413 = vmatmul.mubr.bf16.gmra.mxu0 %v258
    %v414 = vpop.f32.mrf.mxu0
    %v415 = vadd.f32 0.0, %v414
    %v416 = vpop.f32.mrf.mxu0
    %v417 = vpop.f32.mrf.mxu0
    %v418 = vadd.f32 0.0, %v417
    %v419 = vpop.f32.mrf.mxu0
    %420 = vmatprep.mubr.bf16.mxu0 0
    %421 = vmatmul.mubr.bf16.gmra.mxu0 %v259
    %v422 = vpop.f32.mrf.mxu0
    %v423 = vadd.f32 0.0, %v422
    %v424 = vpop.f32.mrf.mxu0
    %v425 = vpop.f32.mrf.mxu0
    %v426 = vadd.f32 0.0, %v425
    %v427 = vpop.f32.mrf.mxu0
    %428 = vmatprep.mubr.bf16.mxu0 0
    %429 = vmatmul.mubr.bf16.gmra.mxu0 %v260
    %v430 = vpop.f32.mrf.mxu0
    %v431 = vadd.f32 0.0, %v430
    %v432 = vpop.f32.mrf.mxu0
    %v433 = vpop.f32.mrf.mxu0
    %v434 = vadd.f32 0.0, %v433
    %v435 = vpop.f32.mrf.mxu0
    %436 = vmatprep.mubr.bf16.mxu0 0
    %437 = vmatmul.mubr.bf16.gmra.mxu0 %v261
    %v438 = vpop.f32.mrf.mxu0
    %v439 = vadd.f32 0.0, %v438
    %v440 = vpop.f32.mrf.mxu0
    %v441 = vpop.f32.mrf.mxu0
    %v442 = vadd.f32 0.0, %v441
    %v443 = vpop.f32.mrf.mxu0
    %444 = vmatprep.mubr.bf16.mxu0 0
    %445 = vmatmul.mubr.bf16.gmra.mxu0 %v262
    %v446 = vpop.f32.mrf.mxu0
    %v447 = vadd.f32 0.0, %v446
    %v448 = vpop.f32.mrf.mxu0
    %v449 = vpop.f32.mrf.mxu0
    %v450 = vadd.f32 0.0, %v449
    %v451 = vpop.f32.mrf.mxu0
    %452 = vmatprep.mubr.bf16.mxu0 0
    %453 = vmatmul.mubr.bf16.gmra.mxu0 %v263
    %v454 = vpop.f32.mrf.mxu0
    %v455 = vadd.f32 0.0, %v454
    %v456 = vpop.f32.mrf.mxu0
    %v457 = vpop.f32.mrf.mxu0
    %v458 = vadd.f32 0.0, %v457
    %v459 = vpop.f32.mrf.mxu0
    %460 = vmatprep.mubr.bf16.mxu0 0
    %461 = vmatmul.mubr.bf16.gmra.mxu0 %v264
    %v462 = vpop.f32.mrf.mxu0
    %v463 = vadd.f32 0.0, %v462
    %v464 = vpop.f32.mrf.mxu0
    %v465 = vpop.f32.mrf.mxu0
    %v466 = vadd.f32 0.0, %v465
    %v467 = vpop.f32.mrf.mxu0
    %468 = vmatprep.mubr.bf16.mxu0 0
    %469 = vmatmul.mubr.bf16.gmra.mxu0 %v265
    %v470 = vpop.f32.mrf.mxu0
    %v471 = vadd.f32 0.0, %v470
    %v472 = vpop.f32.mrf.mxu0
    %v473 = vpop.f32.mrf.mxu0
    %v474 = vadd.f32 0.0, %v473
    %v475 = vpop.f32.mrf.mxu0
    %476 = vmatprep.mubr.bf16.mxu0 0
    %477 = vmatmul.mubr.bf16.gmra.mxu0 %v266
    %v478 = vpop.f32.mrf.mxu0
    %v479 = vadd.f32 0.0, %v478
    %v480 = vpop.f32.mrf.mxu0
    %v481 = vpop.f32.mrf.mxu0
    %v482 = vadd.f32 0.0, %v481
    %v483 = vpop.f32.mrf.mxu0
    %484 = vmatprep.mubr.bf16.mxu0 0
    %485 = vmatmul.mubr.bf16.gmra.mxu0 %v267
    %v486 = vpop.f32.mrf.mxu0
    %v487 = vadd.f32 0.0, %v486
    %v488 = vpop.f32.mrf.mxu0
    %v489 = vpop.f32.mrf.mxu0
    %v490 = vadd.f32 0.0, %v489
    %v491 = vpop.f32.mrf.mxu0
    %492 = vdwg.mxu0
    %v493 = vpack.c.bf16 %v370, %v367
    %v494 = vpack.c.bf16 %v378, %v375
    %v495 = vpack.c.bf16 %v386, %v383
    %v496 = vpack.c.bf16 %v394, %v391
    %v497 = vpack.c.bf16 %v402, %v399
    %v498 = vpack.c.bf16 %v410, %v407
    %v499 = vpack.c.bf16 %v418, %v415
    %v500 = vpack.c.bf16 %v426, %v423
    %v501 = vpack.c.bf16 %v434, %v431
    %v502 = vpack.c.bf16 %v442, %v439
    %v503 = vpack.c.bf16 %v450, %v447
    %v504 = vpack.c.bf16 %v458, %v455
    %v505 = vpack.c.bf16 %v466, %v463
    %v506 = vpack.c.bf16 %v474, %v471
    %v507 = vpack.c.bf16 %v482, %v479
    %v508 = vpack.c.bf16 %v490, %v487
    %v509 = vld [vmem:[#allocation8] sm:$0xf]
    %v510 = vld [vmem:[#allocation8 + $0x4] sm:$0xf]
    %v511 = vld [vmem:[#allocation8 + $0x8] sm:$0xf]
    %v512 = vld [vmem:[#allocation8 + $0xc] sm:$0xf]
    %v513 = vld [vmem:[#allocation8 + $0x10] sm:$0xf]
    %v514 = vld [vmem:[#allocation8 + $0x14] sm:$0xf]
    %v515 = vld [vmem:[#allocation8 + $0x18] sm:$0xf]
    %v516 = vld [vmem:[#allocation8 + $0x1c] sm:$0xf]
    %v517 = vld [vmem:[#allocation8 + $0x20] sm:$0xf]
    %v518 = vld [vmem:[#allocation8 + $0x24] sm:$0xf]
    %v519 = vld [vmem:[#allocation8 + $0x28] sm:$0xf]
    %v520 = vld [vmem:[#allocation8 + $0x2c] sm:$0xf]
    %v521 = vld [vmem:[#allocation8 + $0x30] sm:$0xf]
    %v522 = vld [vmem:[#allocation8 + $0x34] sm:$0xf]
    %v523 = vld [vmem:[#allocation8 + $0x38] sm:$0xf]
    %v524 = vld [vmem:[#allocation8 + $0x3c] sm:$0xf]
    %v525 = vld [vmem:[#allocation10] sm:$0xf]
    %v526 = vld [vmem:[#allocation10 + $0x4] sm:$0xf]
    %v527 = vld [vmem:[#allocation10 + $0x8] sm:$0xf]
    %v528 = vld [vmem:[#allocation10 + $0xc] sm:$0xf]
    %v529 = vld [vmem:[#allocation10 + $0x10] sm:$0xf]
    %v530 = vld [vmem:[#allocation10 + $0x14] sm:$0xf]
    %v531 = vld [vmem:[#allocation10 + $0x18] sm:$0xf]
    %v532 = vld [vmem:[#allocation10 + $0x1c] sm:$0xf]
    %v533 = vld [vmem:[#allocation10 + $0x20] sm:$0xf]
    %v534 = vld [vmem:[#allocation10 + $0x24] sm:$0xf]
    %v535 = vld [vmem:[#allocation10 + $0x28] sm:$0xf]
    %v536 = vld [vmem:[#allocation10 + $0x2c] sm:$0xf]
    %v537 = vld [vmem:[#allocation10 + $0x30] sm:$0xf]
    %v538 = vld [vmem:[#allocation10 + $0x34] sm:$0xf]
    %v539 = vld [vmem:[#allocation10 + $0x38] sm:$0xf]
    %v540 = vld [vmem:[#allocation10 + $0x3c] sm:$0xf]
    %v557 = vunpack.c.l.b16 %v525
    %v558 = vunpack.c.l.b16 %v526
    %v559 = vunpack.c.l.b16 %v527
    %v560 = vunpack.c.l.b16 %v528
    %v561 = vunpack.c.l.b16 %v529
    %v562 = vunpack.c.l.b16 %v530
    %v563 = vunpack.c.l.b16 %v531
    %v564 = vunpack.c.l.b16 %v532
    %v565 = vunpack.c.l.b16 %v533
    %v566 = vunpack.c.l.b16 %v534
    %v567 = vunpack.c.l.b16 %v535
    %v568 = vunpack.c.l.b16 %v536
    %v569 = vunpack.c.l.b16 %v537
    %v570 = vunpack.c.l.b16 %v538
    %v571 = vunpack.c.l.b16 %v539
    %v572 = vunpack.c.l.b16 %v540
    %v573 = vpack.c.b16 %v558, %v557
    %v574 = vpack.c.b16 %v560, %v559
    %v575 = vpack.c.b16 %v562, %v561
    %v576 = vpack.c.b16 %v564, %v563
    %v577 = vpack.c.b16 %v566, %v565
    %v578 = vpack.c.b16 %v568, %v567
    %v579 = vpack.c.b16 %v570, %v569
    %v580 = vpack.c.b16 %v572, %v571
    %589 = vmatprep.subr.bf16.mxu0 0
    %590 = vmatpush1.bf16.msra.mxu0 %v580
    %591 = vmatprep.subr.bf16.mxu0 0
    %592 = vmatpush1.bf16.msra.mxu0 %v579
    %593 = vmatprep.subr.bf16.mxu0 0
    %594 = vmatpush1.bf16.msra.mxu0 %v578
    %595 = vmatprep.subr.bf16.mxu0 0
    %596 = vmatpush1.bf16.msra.mxu0 %v577
    %597 = vmatprep.subr.bf16.mxu0 0
    %598 = vmatpush1.bf16.msra.mxu0 %v576
    %599 = vmatprep.subr.bf16.mxu0 0
    %600 = vmatpush1.bf16.msra.mxu0 %v575
    %601 = vmatprep.subr.bf16.mxu0 0
    %602 = vmatpush1.bf16.msra.mxu0 %v574
    %603 = vmatprep.subr.bf16.mxu0 0
    %604 = vmatpush1.bf16.msra.mxu0 %v573
    %605 = vmatprep.subr.bf16.mxu0 0
    %606 = vmatpush2.bf16.msra.mxu0 0
    %607 = vmatprep.subr.bf16.mxu0 0
    %608 = vmatpush2.bf16.msra.mxu0 0
    %609 = vmatprep.subr.bf16.mxu0 0
    %610 = vmatpush2.bf16.msra.mxu0 0
    %611 = vmatprep.subr.bf16.mxu0 0
    %612 = vmatpush2.bf16.msra.mxu0 0
    %613 = vmatprep.subr.bf16.mxu0 0
    %614 = vmatpush2.bf16.msra.mxu0 0
    %615 = vmatprep.subr.bf16.mxu0 0
    %616 = vmatpush2.bf16.msra.mxu0 0
    %617 = vmatprep.subr.bf16.mxu0 0
    %618 = vmatpush2.bf16.msra.mxu0 0
    %619 = vmatprep.subr.bf16.mxu0 0
    %620 = vmatpush2.bf16.msra.mxu0 0
    %621 = vmatprep.mubr.bf16.mxu0 0
    %622 = vmatmul.mubr.bf16.gmra.mxu0 %v501
    %v623 = vpop.f32.mrf.mxu0
    %v624 = vadd.f32 0.0, %v623
    %v625 = vpop.f32.mrf.mxu0
    %v626 = vpop.f32.mrf.mxu0
    %v627 = vadd.f32 0.0, %v626
    %v628 = vpop.f32.mrf.mxu0
    %629 = vmatprep.mubr.bf16.mxu0 0
    %630 = vmatmul.mubr.bf16.gmra.mxu0 %v502
    %v631 = vpop.f32.mrf.mxu0
    %v632 = vadd.f32 0.0, %v631
    %v633 = vpop.f32.mrf.mxu0
    %v634 = vpop.f32.mrf.mxu0
    %v635 = vadd.f32 0.0, %v634
    %v636 = vpop.f32.mrf.mxu0
    %637 = vmatprep.mubr.bf16.mxu0 0
    %638 = vmatmul.mubr.bf16.gmra.mxu0 %v503
    %v639 = vpop.f32.mrf.mxu0
    %v640 = vadd.f32 0.0, %v639
    %v641 = vpop.f32.mrf.mxu0
    %v642 = vpop.f32.mrf.mxu0
    %v643 = vadd.f32 0.0, %v642
    %v644 = vpop.f32.mrf.mxu0
    %645 = vmatprep.mubr.bf16.mxu0 0
    %646 = vmatmul.mubr.bf16.gmra.mxu0 %v504
    %v647 = vpop.f32.mrf.mxu0
    %v648 = vadd.f32 0.0, %v647
    %v649 = vpop.f32.mrf.mxu0
    %v650 = vpop.f32.mrf.mxu0
    %v651 = vadd.f32 0.0, %v650
    %v652 = vpop.f32.mrf.mxu0
    %653 = vmatprep.mubr.bf16.mxu0 0
    %654 = vmatmul.mubr.bf16.gmra.mxu0 %v505
    %v655 = vpop.f32.mrf.mxu0
    %v656 = vadd.f32 0.0, %v655
    %v657 = vpop.f32.mrf.mxu0
    %v658 = vpop.f32.mrf.mxu0
    %v659 = vadd.f32 0.0, %v658
    %v660 = vpop.f32.mrf.mxu0
    %661 = vmatprep.mubr.bf16.mxu0 0
    %662 = vmatmul.mubr.bf16.gmra.mxu0 %v506
    %v663 = vpop.f32.mrf.mxu0
    %v664 = vadd.f32 0.0, %v663
    %v665 = vpop.f32.mrf.mxu0
    %v666 = vpop.f32.mrf.mxu0
    %v667 = vadd.f32 0.0, %v666
    %v668 = vpop.f32.mrf.mxu0
    %669 = vmatprep.mubr.bf16.mxu0 0
    %670 = vmatmul.mubr.bf16.gmra.mxu0 %v507
    %v671 = vpop.f32.mrf.mxu0
    %v672 = vadd.f32 0.0, %v671
    %v673 = vpop.f32.mrf.mxu0
    %v674 = vpop.f32.mrf.mxu0
    %v675 = vadd.f32 0.0, %v674
    %v676 = vpop.f32.mrf.mxu0
    %677 = vmatprep.mubr.bf16.mxu0 0
    %678 = vmatmul.mubr.bf16.gmra.mxu0 %v508
    %v679 = vpop.f32.mrf.mxu0
    %v680 = vadd.f32 0.0, %v679
    %v681 = vpop.f32.mrf.mxu0
    %v682 = vpop.f32.mrf.mxu0
    %v683 = vadd.f32 0.0, %v682
    %v684 = vpop.f32.mrf.mxu0
    %685 = vdwg.mxu0
    %v702 = vunpack.c.l.b16 %v509
    %v703 = vunpack.c.l.b16 %v510
    %v704 = vunpack.c.l.b16 %v511
    %v705 = vunpack.c.l.b16 %v512
    %v706 = vunpack.c.l.b16 %v513
    %v707 = vunpack.c.l.b16 %v514
    %v708 = vunpack.c.l.b16 %v515
    %v709 = vunpack.c.l.b16 %v516
    %v710 = vunpack.c.l.b16 %v517
    %v711 = vunpack.c.l.b16 %v518
    %v712 = vunpack.c.l.b16 %v519
    %v713 = vunpack.c.l.b16 %v520
    %v714 = vunpack.c.l.b16 %v521
    %v715 = vunpack.c.l.b16 %v522
    %v716 = vunpack.c.l.b16 %v523
    %v717 = vunpack.c.l.b16 %v524
    %v718 = vpack.c.b16 %v703, %v702
    %v719 = vpack.c.b16 %v705, %v704
    %v720 = vpack.c.b16 %v707, %v706
    %v721 = vpack.c.b16 %v709, %v708
    %v722 = vpack.c.b16 %v711, %v710
    %v723 = vpack.c.b16 %v713, %v712
    %v724 = vpack.c.b16 %v715, %v714
    %v725 = vpack.c.b16 %v717, %v716
    %734 = vmatprep.subr.bf16.mxu0 0
    %735 = vmatpush1.bf16.msra.mxu0 %v725
    %736 = vmatprep.subr.bf16.mxu0 0
    %737 = vmatpush1.bf16.msra.mxu0 %v724
    %738 = vmatprep.subr.bf16.mxu0 0
    %739 = vmatpush1.bf16.msra.mxu0 %v723
    %740 = vmatprep.subr.bf16.mxu0 0
    %741 = vmatpush1.bf16.msra.mxu0 %v722
    %742 = vmatprep.subr.bf16.mxu0 0
    %743 = vmatpush1.bf16.msra.mxu0 %v721
    %744 = vmatprep.subr.bf16.mxu0 0
    %745 = vmatpush1.bf16.msra.mxu0 %v720
    %746 = vmatprep.subr.bf16.mxu0 0
    %747 = vmatpush1.bf16.msra.mxu0 %v719
    %748 = vmatprep.subr.bf16.mxu0 0
    %749 = vmatpush1.bf16.msra.mxu0 %v718
    %750 = vmatprep.subr.bf16.mxu0 0
    %751 = vmatpush2.bf16.msra.mxu0 0
    %752 = vmatprep.subr.bf16.mxu0 0
    %753 = vmatpush2.bf16.msra.mxu0 0
    %754 = vmatprep.subr.bf16.mxu0 0
    %755 = vmatpush2.bf16.msra.mxu0 0
    %756 = vmatprep.subr.bf16.mxu0 0
    %757 = vmatpush2.bf16.msra.mxu0 0
    %758 = vmatprep.subr.bf16.mxu0 0
    %759 = vmatpush2.bf16.msra.mxu0 0
    %760 = vmatprep.subr.bf16.mxu0 0
    %761 = vmatpush2.bf16.msra.mxu0 0
    %762 = vmatprep.subr.bf16.mxu0 0
    %763 = vmatpush2.bf16.msra.mxu0 0
    %764 = vmatprep.subr.bf16.mxu0 0
    %765 = vmatpush2.bf16.msra.mxu0 0
    %766 = vmatprep.mubr.bf16.mxu0 0
    %767 = vmatmul.mubr.bf16.gmra.mxu0 %v493
    %v768 = vpop.f32.mrf.mxu0
    %v769 = vadd.f32 %v624, %v768
    %v770 = vpop.f32.mrf.mxu0
    %v771 = vpop.f32.mrf.mxu0
    %v772 = vadd.f32 %v627, %v771
    %v773 = vpop.f32.mrf.mxu0
    %774 = vmatprep.mubr.bf16.mxu0 0
    %775 = vmatmul.mubr.bf16.gmra.mxu0 %v494
    %v776 = vpop.f32.mrf.mxu0
    %v777 = vadd.f32 %v632, %v776
    %v778 = vpop.f32.mrf.mxu0
    %v779 = vpop.f32.mrf.mxu0
    %v780 = vadd.f32 %v635, %v779
    %v781 = vpop.f32.mrf.mxu0
    %782 = vmatprep.mubr.bf16.mxu0 0
    %783 = vmatmul.mubr.bf16.gmra.mxu0 %v495
    %v784 = vpop.f32.mrf.mxu0
    %v785 = vadd.f32 %v640, %v784
    %v786 = vpop.f32.mrf.mxu0
    %v787 = vpop.f32.mrf.mxu0
    %v788 = vadd.f32 %v643, %v787
    %v789 = vpop.f32.mrf.mxu0
    %790 = vmatprep.mubr.bf16.mxu0 0
    %791 = vmatmul.mubr.bf16.gmra.mxu0 %v496
    %v792 = vpop.f32.mrf.mxu0
    %v793 = vadd.f32 %v648, %v792
    %v794 = vpop.f32.mrf.mxu0
    %v795 = vpop.f32.mrf.mxu0
    %v796 = vadd.f32 %v651, %v795
    %v797 = vpop.f32.mrf.mxu0
    %798 = vmatprep.mubr.bf16.mxu0 0
    %799 = vmatmul.mubr.bf16.gmra.mxu0 %v497
    %v800 = vpop.f32.mrf.mxu0
    %v801 = vadd.f32 %v656, %v800
    %v802 = vpop.f32.mrf.mxu0
    %v803 = vpop.f32.mrf.mxu0
    %v804 = vadd.f32 %v659, %v803
    %v805 = vpop.f32.mrf.mxu0
    %806 = vmatprep.mubr.bf16.mxu0 0
    %807 = vmatmul.mubr.bf16.gmra.mxu0 %v498
    %v808 = vpop.f32.mrf.mxu0
    %v809 = vadd.f32 %v664, %v808
    %v810 = vpop.f32.mrf.mxu0
    %v811 = vpop.f32.mrf.mxu0
    %v812 = vadd.f32 %v667, %v811
    %v813 = vpop.f32.mrf.mxu0
    %814 = vmatprep.mubr.bf16.mxu0 0
    %815 = vmatmul.mubr.bf16.gmra.mxu0 %v499
    %v816 = vpop.f32.mrf.mxu0
    %v817 = vadd.f32 %v672, %v816
    %v818 = vpop.f32.mrf.mxu0
    %v819 = vpop.f32.mrf.mxu0
    %v820 = vadd.f32 %v675, %v819
    %v821 = vpop.f32.mrf.mxu0
    %822 = vmatprep.mubr.bf16.mxu0 0
    %823 = vmatmul.mubr.bf16.gmra.mxu0 %v500
    %v824 = vpop.f32.mrf.mxu0
    %v825 = vadd.f32 %v680, %v824
    %v826 = vpop.f32.mrf.mxu0
    %v827 = vpop.f32.mrf.mxu0
    %v828 = vadd.f32 %v683, %v827
    %v829 = vpop.f32.mrf.mxu0
    %830 = vdwg.mxu0
    %v831 = vmax.f32 %v769, 0.0
    %v832 = vmax.f32 %v772, 0.0
    %v833 = vmax.f32 %v777, 0.0
    %v834 = vmax.f32 %v780, 0.0
    %v835 = vmax.f32 %v785, 0.0
    %v836 = vmax.f32 %v788, 0.0
    %v837 = vmax.f32 %v793, 0.0
    %v838 = vmax.f32 %v796, 0.0
    %v839 = vmax.f32 %v801, 0.0
    %v840 = vmax.f32 %v804, 0.0
    %v841 = vmax.f32 %v809, 0.0
    %v842 = vmax.f32 %v812, 0.0
    %v843 = vmax.f32 %v817, 0.0
    %v844 = vmax.f32 %v820, 0.0
    %v845 = vmax.f32 %v825, 0.0
    %v846 = vmax.f32 %v828, 0.0
    %v847 = vpack.c.bf16 %v832, %v831
    %v848 = vpack.c.bf16 %v834, %v833
    %v849 = vpack.c.bf16 %v836, %v835
    %v850 = vpack.c.bf16 %v838, %v837
    %v851 = vpack.c.bf16 %v840, %v839
    %v852 = vpack.c.bf16 %v842, %v841
    %v853 = vpack.c.bf16 %v844, %v843
    %v854 = vpack.c.bf16 %v846, %v845
    %v855 = vld [vmem:[#allocation7] sm:$0xf]
    %v856 = vld [vmem:[#allocation7 + $0x4] sm:$0xf]
    %v859 = vunpack.c.l.b16 %v855
    %v860 = vunpack.c.l.b16 %v856
    %v861 = vpack.c.b16 %v860, %v859
    %863 = vmatprep.subr.bf16.mxu0 0
    %864 = vmatpush1.bf16.msra.mxu0 %v854
    %865 = vmatprep.subr.bf16.mxu0 0
    %866 = vmatpush1.bf16.msra.mxu0 %v853
    %867 = vmatprep.subr.bf16.mxu0 0
    %868 = vmatpush1.bf16.msra.mxu0 %v852
    %869 = vmatprep.subr.bf16.mxu0 0
    %870 = vmatpush1.bf16.msra.mxu0 %v851
    %871 = vmatprep.subr.bf16.mxu0 0
    %872 = vmatpush1.bf16.msra.mxu0 %v850
    %873 = vmatprep.subr.bf16.mxu0 0
    %874 = vmatpush1.bf16.msra.mxu0 %v849
    %875 = vmatprep.subr.bf16.mxu0 0
    %876 = vmatpush1.bf16.msra.mxu0 %v848
    %877 = vmatprep.subr.bf16.mxu0 0
    %878 = vmatpush1.bf16.msra.mxu0 %v847
    %879 = vmatprep.subr.bf16.mxu0 0
    %880 = vmatpush2.bf16.msra.mxu0 0
    %881 = vmatprep.subr.bf16.mxu0 0
    %882 = vmatpush2.bf16.msra.mxu0 0
    %883 = vmatprep.subr.bf16.mxu0 0
    %884 = vmatpush2.bf16.msra.mxu0 0
    %885 = vmatprep.subr.bf16.mxu0 0
    %886 = vmatpush2.bf16.msra.mxu0 0
    %887 = vmatprep.subr.bf16.mxu0 0
    %888 = vmatpush2.bf16.msra.mxu0 0
    %889 = vmatprep.subr.bf16.mxu0 0
    %890 = vmatpush2.bf16.msra.mxu0 0
    %891 = vmatprep.subr.bf16.mxu0 0
    %892 = vmatpush2.bf16.msra.mxu0 0
    %893 = vmatprep.subr.bf16.mxu0 0
    %894 = vmatpush2.bf16.msra.mxu0 0
    %895 = vmatprep.mubr.bf16.mxu0 0
    %896 = vmatmul.mubr.bf16.gmra.mxu0 %v861
    %v897 = vpop.f32.mrf.mxu0
    %v898 = vadd.f32 0.0, %v897
    %v899 = vpop.f32.mrf.mxu0
    %v900 = vpop.f32.mrf.mxu0
    %v901 = vadd.f32 0.0, %v900
    %v902 = vpop.f32.mrf.mxu0
    %903 = vdwg.mxu0
    %v904 = vpack.c.bf16 %v898, %v898
    %v905 = vpack.c.bf16 %v901, %v901
    %v906 = vld [vmem:[#allocation11] sm:$0xf]
    %v907 = vld [vmem:[#allocation11 + $0x4] sm:$0xf]
    %v908 = vld [vmem:[#allocation11 + $0x8] sm:$0xf]
    %v909 = vld [vmem:[#allocation11 + $0xc] sm:$0xf]
    %v910 = vld [vmem:[#allocation11 + $0x10] sm:$0xf]
    %v911 = vld [vmem:[#allocation11 + $0x14] sm:$0xf]
    %v912 = vld [vmem:[#allocation11 + $0x18] sm:$0xf]
    %v913 = vld [vmem:[#allocation11 + $0x1c] sm:$0xf]
    %v914 = vld [vmem:[#allocation11 + $0x20] sm:$0xf]
    %v915 = vld [vmem:[#allocation11 + $0x24] sm:$0xf]
    %v916 = vld [vmem:[#allocation11 + $0x28] sm:$0xf]
    %v917 = vld [vmem:[#allocation11 + $0x2c] sm:$0xf]
    %v918 = vld [vmem:[#allocation11 + $0x30] sm:$0xf]
    %v919 = vld [vmem:[#allocation11 + $0x34] sm:$0xf]
    %v920 = vld [vmem:[#allocation11 + $0x38] sm:$0xf]
    %v921 = vld [vmem:[#allocation11 + $0x3c] sm:$0xf]
    %v922 = vld [vmem:[#allocation13] sm:$0xf]
    %v923 = vld [vmem:[#allocation13 + $0x4] sm:$0xf]
    %v924 = vld [vmem:[#allocation13 + $0x8] sm:$0xf]
    %v925 = vld [vmem:[#allocation13 + $0xc] sm:$0xf]
    %v926 = vld [vmem:[#allocation13 + $0x10] sm:$0xf]
    %v927 = vld [vmem:[#allocation13 + $0x14] sm:$0xf]
    %v928 = vld [vmem:[#allocation13 + $0x18] sm:$0xf]
    %v929 = vld [vmem:[#allocation13 + $0x1c] sm:$0xf]
    %v930 = vld [vmem:[#allocation13 + $0x20] sm:$0xf]
    %v931 = vld [vmem:[#allocation13 + $0x24] sm:$0xf]
    %v932 = vld [vmem:[#allocation13 + $0x28] sm:$0xf]
    %v933 = vld [vmem:[#allocation13 + $0x2c] sm:$0xf]
    %v934 = vld [vmem:[#allocation13 + $0x30] sm:$0xf]
    %v935 = vld [vmem:[#allocation13 + $0x34] sm:$0xf]
    %v936 = vld [vmem:[#allocation13 + $0x38] sm:$0xf]
    %v937 = vld [vmem:[#allocation13 + $0x3c] sm:$0xf]
    %v954 = vunpack.c.l.b16 %v922
    %v955 = vunpack.c.l.b16 %v923
    %v956 = vunpack.c.l.b16 %v924
    %v957 = vunpack.c.l.b16 %v925
    %v958 = vunpack.c.l.b16 %v926
    %v959 = vunpack.c.l.b16 %v927
    %v960 = vunpack.c.l.b16 %v928
    %v961 = vunpack.c.l.b16 %v929
    %v962 = vunpack.c.l.b16 %v930
    %v963 = vunpack.c.l.b16 %v931
    %v964 = vunpack.c.l.b16 %v932
    %v965 = vunpack.c.l.b16 %v933
    %v966 = vunpack.c.l.b16 %v934
    %v967 = vunpack.c.l.b16 %v935
    %v968 = vunpack.c.l.b16 %v936
    %v969 = vunpack.c.l.b16 %v937
    %v970 = vpack.c.b16 %v955, %v954
    %v971 = vpack.c.b16 %v957, %v956
    %v972 = vpack.c.b16 %v959, %v958
    %v973 = vpack.c.b16 %v961, %v960
    %v974 = vpack.c.b16 %v963, %v962
    %v975 = vpack.c.b16 %v965, %v964
    %v976 = vpack.c.b16 %v967, %v966
    %v977 = vpack.c.b16 %v969, %v968
    %986 = vmatprep.subr.bf16.mxu0 0
    %987 = vmatpush1.bf16.msra.mxu0 %v977
    %988 = vmatprep.subr.bf16.mxu0 0
    %989 = vmatpush1.bf16.msra.mxu0 %v976
    %990 = vmatprep.subr.bf16.mxu0 0
    %991 = vmatpush1.bf16.msra.mxu0 %v975
    %992 = vmatprep.subr.bf16.mxu0 0
    %993 = vmatpush1.bf16.msra.mxu0 %v974
    %994 = vmatprep.subr.bf16.mxu0 0
    %995 = vmatpush1.bf16.msra.mxu0 %v973
    %996 = vmatprep.subr.bf16.mxu0 0
    %997 = vmatpush1.bf16.msra.mxu0 %v972
    %998 = vmatprep.subr.bf16.mxu0 0
    %999 = vmatpush1.bf16.msra.mxu0 %v971
    %1000 = vmatprep.subr.bf16.mxu0 0
    %1001 = vmatpush1.bf16.msra.mxu0 %v970
    %1002 = vmatprep.subr.bf16.mxu0 0
    %1003 = vmatpush2.bf16.msra.mxu0 0
    %1004 = vmatprep.subr.bf16.mxu0 0
    %1005 = vmatpush2.bf16.msra.mxu0 0
    %1006 = vmatprep.subr.bf16.mxu0 0
    %1007 = vmatpush2.bf16.msra.mxu0 0
    %1008 = vmatprep.subr.bf16.mxu0 0
    %1009 = vmatpush2.bf16.msra.mxu0 0
    %1010 = vmatprep.subr.bf16.mxu0 0
    %1011 = vmatpush2.bf16.msra.mxu0 0
    %1012 = vmatprep.subr.bf16.mxu0 0
    %1013 = vmatpush2.bf16.msra.mxu0 0
    %1014 = vmatprep.subr.bf16.mxu0 0
    %1015 = vmatpush2.bf16.msra.mxu0 0
    %1016 = vmatprep.subr.bf16.mxu0 0
    %1017 = vmatpush2.bf16.msra.mxu0 0
    %1018 = vmatprep.mubr.bf16.mxu0 0
    %1019 = vmatmul.mubr.bf16.gmra.mxu0 %v905
    %v1020 = vpop.f32.mrf.mxu0
    %v1021 = vadd.f32 0.0, %v1020
    %v1022 = vpop.f32.mrf.mxu0
    %v1023 = vpop.f32.mrf.mxu0
    %v1024 = vpop.f32.mrf.mxu0
    %1025 = vdwg.mxu0
    %v1042 = vunpack.c.l.b16 %v906
    %v1043 = vunpack.c.l.b16 %v907
    %v1044 = vunpack.c.l.b16 %v908
    %v1045 = vunpack.c.l.b16 %v909
    %v1046 = vunpack.c.l.b16 %v910
    %v1047 = vunpack.c.l.b16 %v911
    %v1048 = vunpack.c.l.b16 %v912
    %v1049 = vunpack.c.l.b16 %v913
    %v1050 = vunpack.c.l.b16 %v914
    %v1051 = vunpack.c.l.b16 %v915
    %v1052 = vunpack.c.l.b16 %v916
    %v1053 = vunpack.c.l.b16 %v917
    %v1054 = vunpack.c.l.b16 %v918
    %v1055 = vunpack.c.l.b16 %v919
    %v1056 = vunpack.c.l.b16 %v920
    %v1057 = vunpack.c.l.b16 %v921
    %v1058 = vpack.c.b16 %v1043, %v1042
    %v1059 = vpack.c.b16 %v1045, %v1044
    %v1060 = vpack.c.b16 %v1047, %v1046
    %v1061 = vpack.c.b16 %v1049, %v1048
    %v1062 = vpack.c.b16 %v1051, %v1050
    %v1063 = vpack.c.b16 %v1053, %v1052
    %v1064 = vpack.c.b16 %v1055, %v1054
    %v1065 = vpack.c.b16 %v1057, %v1056
    %1074 = vmatprep.subr.bf16.mxu0 0
    %1075 = vmatpush1.bf16.msra.mxu0 %v1065
    %1076 = vmatprep.subr.bf16.mxu0 0
    %1077 = vmatpush1.bf16.msra.mxu0 %v1064
    %1078 = vmatprep.subr.bf16.mxu0 0
    %1079 = vmatpush1.bf16.msra.mxu0 %v1063
    %1080 = vmatprep.subr.bf16.mxu0 0
    %1081 = vmatpush1.bf16.msra.mxu0 %v1062
    %1082 = vmatprep.subr.bf16.mxu0 0
    %1083 = vmatpush1.bf16.msra.mxu0 %v1061
    %1084 = vmatprep.subr.bf16.mxu0 0
    %1085 = vmatpush1.bf16.msra.mxu0 %v1060
    %1086 = vmatprep.subr.bf16.mxu0 0
    %1087 = vmatpush1.bf16.msra.mxu0 %v1059
    %1088 = vmatprep.subr.bf16.mxu0 0
    %1089 = vmatpush1.bf16.msra.mxu0 %v1058
    %1090 = vmatprep.subr.bf16.mxu0 0
    %1091 = vmatpush2.bf16.msra.mxu0 0
    %1092 = vmatprep.subr.bf16.mxu0 0
    %1093 = vmatpush2.bf16.msra.mxu0 0
    %1094 = vmatprep.subr.bf16.mxu0 0
    %1095 = vmatpush2.bf16.msra.mxu0 0
    %1096 = vmatprep.subr.bf16.mxu0 0
    %1097 = vmatpush2.bf16.msra.mxu0 0
    %1098 = vmatprep.subr.bf16.mxu0 0
    %1099 = vmatpush2.bf16.msra.mxu0 0
    %1100 = vmatprep.subr.bf16.mxu0 0
    %1101 = vmatpush2.bf16.msra.mxu0 0
    %1102 = vmatprep.subr.bf16.mxu0 0
    %1103 = vmatpush2.bf16.msra.mxu0 0
    %1104 = vmatprep.subr.bf16.mxu0 0
    %1105 = vmatpush2.bf16.msra.mxu0 0
    %1106 = vmatprep.mubr.bf16.mxu0 0
    %1107 = vmatmul.mubr.bf16.gmra.mxu0 %v904
    %v1108 = vpop.f32.mrf.mxu0
    %v1109 = vadd.f32 %v1021, %v1108
    %v1110 = vpop.f32.mrf.mxu0
    %v1111 = vpop.f32.mrf.mxu0
    %v1112 = vpop.f32.mrf.mxu0
    %1113 = vdwg.mxu0
    %v1114 = vmax.f32 %v1109, 0.0
    %v1115 = vpack.c.bf16 %v1114, %v1114
    %v1116 = vld [vmem:[#allocation14] sm:$0xf]
    %v1117 = vld [vmem:[#allocation14 + $0x4] sm:$0xf]
    %v1118 = vld [vmem:[#allocation14 + $0x8] sm:$0xf]
    %v1119 = vld [vmem:[#allocation14 + $0xc] sm:$0xf]
    %v1120 = vld [vmem:[#allocation14 + $0x10] sm:$0xf]
    %v1121 = vld [vmem:[#allocation14 + $0x14] sm:$0xf]
    %v1122 = vld [vmem:[#allocation14 + $0x18] sm:$0xf]
    %v1123 = vld [vmem:[#allocation14 + $0x1c] sm:$0xf]
    %v1124 = vld [vmem:[#allocation14 + $0x20] sm:$0xf]
    %v1125 = vld [vmem:[#allocation14 + $0x24] sm:$0xf]
    %v1126 = vld [vmem:[#allocation14 + $0x28] sm:$0xf]
    %v1127 = vld [vmem:[#allocation14 + $0x2c] sm:$0xf]
    %v1128 = vld [vmem:[#allocation14 + $0x30] sm:$0xf]
    %v1129 = vld [vmem:[#allocation14 + $0x34] sm:$0xf]
    %v1130 = vld [vmem:[#allocation14 + $0x38] sm:$0xf]
    %v1131 = vld [vmem:[#allocation14 + $0x3c] sm:$0xf]
    %v1148 = vunpack.c.l.b16 %v1116
    %v1149 = vunpack.c.l.b16 %v1117
    %v1150 = vunpack.c.l.b16 %v1118
    %v1151 = vunpack.c.l.b16 %v1119
    %v1152 = vunpack.c.l.b16 %v1120
    %v1153 = vunpack.c.l.b16 %v1121
    %v1154 = vunpack.c.l.b16 %v1122
    %v1155 = vunpack.c.l.b16 %v1123
    %v1156 = vunpack.c.l.b16 %v1124
    %v1157 = vunpack.c.l.b16 %v1125
    %v1158 = vunpack.c.l.b16 %v1126
    %v1159 = vunpack.c.l.b16 %v1127
    %v1160 = vunpack.c.l.b16 %v1128
    %v1161 = vunpack.c.l.b16 %v1129
    %v1162 = vunpack.c.l.b16 %v1130
    %v1163 = vunpack.c.l.b16 %v1131
    %v1164 = vpack.c.b16 %v1149, %v1148
    %v1165 = vpack.c.b16 %v1151, %v1150
    %v1166 = vpack.c.b16 %v1153, %v1152
    %v1167 = vpack.c.b16 %v1155, %v1154
    %v1168 = vpack.c.b16 %v1157, %v1156
    %v1169 = vpack.c.b16 %v1159, %v1158
    %v1170 = vpack.c.b16 %v1161, %v1160
    %v1171 = vpack.c.b16 %v1163, %v1162
    %1180 = vmatprep.subr.bf16.mxu0 0
    %1181 = vmatpush1.bf16.msra.mxu0 %v1171
    %1182 = vmatprep.subr.bf16.mxu0 0
    %1183 = vmatpush1.bf16.msra.mxu0 %v1170
    %1184 = vmatprep.subr.bf16.mxu0 0
    %1185 = vmatpush1.bf16.msra.mxu0 %v1169
    %1186 = vmatprep.subr.bf16.mxu0 0
    %1187 = vmatpush1.bf16.msra.mxu0 %v1168
    %1188 = vmatprep.subr.bf16.mxu0 0
    %1189 = vmatpush1.bf16.msra.mxu0 %v1167
    %1190 = vmatprep.subr.bf16.mxu0 0
    %1191 = vmatpush1.bf16.msra.mxu0 %v1166
    %1192 = vmatprep.subr.bf16.mxu0 0
    %1193 = vmatpush1.bf16.msra.mxu0 %v1165
    %1194 = vmatprep.subr.bf16.mxu0 0
    %1195 = vmatpush1.bf16.msra.mxu0 %v1164
    %1196 = vmatprep.subr.bf16.mxu0 0
    %1197 = vmatpush2.bf16.msra.mxu0 0
    %1198 = vmatprep.subr.bf16.mxu0 0
    %1199 = vmatpush2.bf16.msra.mxu0 0
    %1200 = vmatprep.subr.bf16.mxu0 0
    %1201 = vmatpush2.bf16.msra.mxu0 0
    %1202 = vmatprep.subr.bf16.mxu0 0
    %1203 = vmatpush2.bf16.msra.mxu0 0
    %1204 = vmatprep.subr.bf16.mxu0 0
    %1205 = vmatpush2.bf16.msra.mxu0 0
    %1206 = vmatprep.subr.bf16.mxu0 0
    %1207 = vmatpush2.bf16.msra.mxu0 0
    %1208 = vmatprep.subr.bf16.mxu0 0
    %1209 = vmatpush2.bf16.msra.mxu0 0
    %1210 = vmatprep.subr.bf16.mxu0 0
    %1211 = vmatpush2.bf16.msra.mxu0 0
    %1212 = vmatprep.mubr.bf16.mxu0 0
    %1213 = vmatmul.mubr.bf16.gmra.mxu0 %v1115
    %v1214 = vpop.f32.mrf.mxu0
    %v1215 = vadd.f32 0.0, %v1214
    %v1216 = vpop.f32.mrf.mxu0
    %v1217 = vpop.f32.mrf.mxu0
    %v1218 = vpop.f32.mrf.mxu0
    %1219 = vdwg.mxu0
    %v1220 = vlaneseq
    %v1221 = vand.u32 %v1220, 127
    %vm1222 = vcmp.lt.s32.totalorder %v1221, 8
    %v1223 = vsel %vm1222, %v1215, -1e+30
    %1224 = vmax.xlane.f32.xlu0 %v1223
    %v1225 = vpop.xlane.xlu0 %1224
    %v1226 = vsub.f32 %v1223, %v1225
    %v1227 = vmul.f32 %v1226, 1.442695
    %v1228 = vpow.pop %v1227
    %1229 = vadd.xlane.f32.xlu0 %v1228
    %v1230 = vpop.xlane.xlu0 %1229
    %v1231 = vlog2.pop %v1230
    %v1232 = vmul.f32 %v1231, 0.6931472
    %v1233 = vsub.f32 %v1226, %v1232
    %v1234 = vsel %vm1222, %v1233, -1e+30
    %1235 = vst [vmem:[#allocation16] sm:$0xff] %v1234
    // Predicated region
    $region66: #{tpu_custom_call.1} parent=1 // pred_check
      _
    $region67: #{tpu_custom_call.1} parent=1 // pred_check_branch
      %1237 = sbr.rel (0) target = $region69
    $region68: #{tpu_custom_call.1} parent=1 // pred_region
      %s1239 = ssub.s32 128, 128
      %1240 = vsyncadd [#allocation4], %s1239
      %s1242 = sshll.u32 [#allocation16], 4
      %s1243 = int_to_ptr.vmem [resolvable:$true] %s1242
      %1245 = dma.vmem_to_hbm [thread:$0]  %s1243, 128, %s8, [#allocation4]
    $region69: #{tpu_custom_call.1} parent=1 // pred_fallthru
      _
    // Predicated region
    $region70: #{tpu_custom_call.1} parent=1 // pred_check
      _
    $region71: #{tpu_custom_call.1} parent=1 // pred_check_branch
      %1247 = sbr.rel (0) target = $region73
    $region72: #{tpu_custom_call.1} parent=1 // pred_region
      %1248 = dma.done [#allocation4], 128
    $region73: #{tpu_custom_call.1} parent=1 // pred_fallthru
      _
    %1249 = vsyncpa [#allocation3], 1
    %1250 = vsyncpa [#allocation6], 1
    %1251 = vsyncpa [#allocation9], 1
    %1252 = vsyncpa [#allocation12], 1
    %1253 = vsyncpa [#allocation15], 1
    %1254 = vsyncpa [#allocation4], 1

</llo_original>
